<compile_context>
chip_gen: v7x
topology: tpu7x:2x2x1
jax: 0.10.0
libtpu: 0.0.40
codegen_flags: <defaults>
</compile_context>

<pallas_src>
import jax
import jax.numpy as jnp
from jax.experimental import pallas as pl
from jax.experimental.pallas import tpu as pltpu

INPUT_SIZE = 100
HIDDEN = 64


def _round_up(n, m):
    return ((n + m - 1) // m) * m


def mlp_kernel(x_ref, w1_ref, b1_ref, w2_ref, b2_ref, o_ref):
    # x_ref:  (bm, INPUT_SIZE)
    # w1_ref: (INPUT_SIZE, HIDDEN), b1_ref: (1, HIDDEN)
    # w2_ref: (1, HIDDEN)  (second-layer weights as a row vector)
    # b2_ref: (1, 1)
    # o_ref:  (bm, 1)
    h = jnp.dot(x_ref[...], w1_ref[...], preferred_element_type=jnp.float32)
    h = jnp.maximum(h + b1_ref[...], 0.0)  # bias + ReLU
    # Dropout(0.3): identity at inference time (eval mode).
    # TODO(synk): training-mode dropout (pltpu.prng_seed(seed + pl.program_id(0))
    #             + random mask + 1/(1-p) scaling) not emitted here.
    # Second layer: N=1 output column -> VPU multiply + XLU row reduce instead
    # of wasting an MXU matmul on a single useful column.
    out = jnp.sum(h * w2_ref[...], axis=-1, keepdims=True) + b2_ref[...]
    o_ref[...] = out.astype(o_ref.dtype)


def feature_classifier_forward(x, w1, b1, w2, b2, *, bm=2048):
    """x: (B, 100) f32; w1: (100, 64); b1: (64,); w2: (64, 1); b2: (1,)."""
    B, D = x.shape
    assert D == INPUT_SIZE

    # Clamp the batch tile for small batches; keep it a multiple of 8 (sublanes).
    bm = min(bm, _round_up(B, 8))
    bm = max(bm, 8)

    # Pad the batch up to a multiple of the tile so any B is accepted.
    B_pad = _round_up(B, bm)
    if B_pad != B:
        x = jnp.pad(x, ((0, B_pad - B), (0, 0)))

    b1_2d = b1.reshape(1, HIDDEN)
    w2_row = w2.reshape(1, HIDDEN)   # (64, 1) -> (1, 64) row vector
    b2_2d = b2.reshape(1, 1)

    grid = (B_pad // bm,)
    out = pl.pallas_call(
        mlp_kernel,
        out_shape=jax.ShapeDtypeStruct((B_pad, 1), x.dtype),
        grid_spec=pltpu.PrefetchScalarGridSpec(
            num_scalar_prefetch=0,
            grid=grid,
            in_specs=[
                pl.BlockSpec((bm, INPUT_SIZE), lambda i: (i, 0)),
                pl.BlockSpec((INPUT_SIZE, HIDDEN), lambda i: (0, 0)),
                pl.BlockSpec((1, HIDDEN), lambda i: (0, 0)),
                pl.BlockSpec((1, HIDDEN), lambda i: (0, 0)),
                pl.BlockSpec((1, 1), lambda i: (0, 0)),
            ],
            out_specs=pl.BlockSpec((bm, 1), lambda i: (i, 0)),
        ),
        compiler_params=pltpu.CompilerParams(
            dimension_semantics=("parallel",),
        ),
    )(x, w1, b1_2d, w2_row, b2_2d)

    return out[:B]


def init_params(key):
    # Deterministic init mimicking nn.Linear default (uniform in +/- 1/sqrt(fan_in)).
    k1, k2, k3, k4 = jax.random.split(key, 4)
    bound1 = 1.0 / jnp.sqrt(float(INPUT_SIZE))
    bound2 = 1.0 / jnp.sqrt(float(HIDDEN))
    w1 = jax.random.uniform(k1, (INPUT_SIZE, HIDDEN), jnp.float32, -bound1, bound1)
    b1 = jax.random.uniform(k2, (HIDDEN,), jnp.float32, -bound1, bound1)
    w2 = jax.random.uniform(k3, (HIDDEN, 1), jnp.float32, -bound2, bound2)
    b2 = jax.random.uniform(k4, (1,), jnp.float32, -bound2, bound2)
    return w1, b1, w2, b2


if __name__ == "__main__":
    key = jax.random.PRNGKey(0)
    k_x, k_p = jax.random.split(key)
    w1, b1, w2, b2 = init_params(k_p)

    def ref_fn(x):
        h = jnp.maximum(x @ w1 + b1, 0.0)
        return h @ w2 + b2

    # Small batch (single tile, no padding).
    B = 8
    x = jax.random.normal(k_x, (B, INPUT_SIZE), dtype=jnp.float32)
    out = jax.block_until_ready(feature_classifier_forward(x, w1, b1, w2, b2))
    assert out.shape == (B, 1)
    assert jnp.allclose(out, ref_fn(x), atol=1e-5, rtol=1e-5)

    # Ragged small batch (exercises the wrapper-side padding path).
    B2 = 20
    x2 = jax.random.normal(jax.random.PRNGKey(1), (B2, INPUT_SIZE), dtype=jnp.float32)
    out2 = jax.block_until_ready(feature_classifier_forward(x2, w1, b1, w2, b2))
    assert out2.shape == (B2, 1)
    assert jnp.allclose(out2, ref_fn(x2), atol=1e-5, rtol=1e-5)

    print("KERNEL_OK")
</pallas_src>

<mosaic_0001>
module attributes {stable_mosaic.version = 11 : i64} {
  func.func @mlp_kernel(%arg0: i32, %arg1: memref<8x100xf32, #tpu.memory_space<vmem>>, %arg2: memref<100x64xf32, #tpu.memory_space<vmem>>, %arg3: memref<1x64xf32, #tpu.memory_space<vmem>>, %arg4: memref<1x64xf32, #tpu.memory_space<vmem>>, %arg5: memref<1x1xf32, #tpu.memory_space<vmem>>, %arg6: memref<8x1xf32, #tpu.memory_space<vmem>>) attributes {dimension_semantics = [#tpu.dimension_semantics<parallel>], iteration_bounds = array<i64: 1>, scalar_prefetch = 0 : i64, scratch_operands = 0 : i64, tpu.core_type = #tpu.core_type<tc>, window_params = [{transform_indices = @transform_0, window_bounds = array<i64: 8, 100>}, {pipeline_mode = #tpu.pipeline_mode<synchronous>, transform_indices = @transform_1, window_bounds = array<i64: 100, 64>}, {pipeline_mode = #tpu.pipeline_mode<synchronous>, transform_indices = @transform_2, window_bounds = array<i64: 1, 64>}, {pipeline_mode = #tpu.pipeline_mode<synchronous>, transform_indices = @transform_3, window_bounds = array<i64: 1, 64>}, {pipeline_mode = #tpu.pipeline_mode<synchronous>, transform_indices = @transform_4, window_bounds = array<i64: 1, 1>}, {transform_indices = @transform_5, window_bounds = array<i64: 8, 1>}]} {
    %c0 = arith.constant 0 : index
    %c0_0 = arith.constant 0 : index
    %0 = vector.load %arg1[%c0, %c0_0] : memref<8x100xf32, #tpu.memory_space<vmem>>, vector<8x100xf32>
    %c0_1 = arith.constant 0 : index
    %c0_2 = arith.constant 0 : index
    %1 = vector.load %arg2[%c0_1, %c0_2] : memref<100x64xf32, #tpu.memory_space<vmem>>, vector<100x64xf32>
    %cst = arith.constant dense<0.000000e+00> : vector<8x64xf32>
    %2 = tpu.matmul %0, %1, %cst {dimension_numbers = #tpu.dot_dimension_numbers<[1], [0], [0], [1], [0, 0, 1, 1], [], []>} : vector<8x100xf32>, vector<100x64xf32>, vector<8x64xf32> -> vector<8x64xf32>
    %c0_3 = arith.constant 0 : index
    %c0_4 = arith.constant 0 : index
    %3 = vector.load %arg3[%c0_3, %c0_4] : memref<1x64xf32, #tpu.memory_space<vmem>>, vector<1x64xf32>
    %4 = vector.broadcast %3 : vector<1x64xf32> to vector<8x64xf32>
    %5 = arith.addf %2, %4 : vector<8x64xf32>
    %cst_5 = arith.constant 0.000000e+00 : f32
    %6 = vector.broadcast %cst_5 : f32 to vector<8x64xf32>
    %7 = arith.maximumf %5, %6 : vector<8x64xf32>
    %c0_6 = arith.constant 0 : index
    %c0_7 = arith.constant 0 : index
    %8 = vector.load %arg4[%c0_6, %c0_7] : memref<1x64xf32, #tpu.memory_space<vmem>>, vector<1x64xf32>
    %9 = vector.broadcast %8 : vector<1x64xf32> to vector<8x64xf32>
    %10 = arith.mulf %7, %9 : vector<8x64xf32>
    %cst_8 = arith.constant dense<0.000000e+00> : vector<8xf32>
    %11 = vector.multi_reduction <add>, %10, %cst_8 [1] : vector<8x64xf32> to vector<8xf32>
    %12 = vector.shape_cast %11 : vector<8xf32> to vector<8x1xf32>
    %c0_9 = arith.constant 0 : index
    %c0_10 = arith.constant 0 : index
    %13 = vector.load %arg5[%c0_9, %c0_10] : memref<1x1xf32, #tpu.memory_space<vmem>>, vector<1x1xf32>
    %14 = vector.broadcast %13 : vector<1x1xf32> to vector<8x1xf32>
    %15 = arith.addf %12, %14 : vector<8x1xf32>
    %c0_11 = arith.constant 0 : index
    %c0_12 = arith.constant 0 : index
    %16 = vector.load %arg6[%c0_11, %c0_12] : memref<8x1xf32, #tpu.memory_space<vmem>>, vector<8x1xf32>
    tpu.vector_store %arg6[%c0_11, %c0_12], %15 {strides = array<i32>} : memref<8x1xf32, #tpu.memory_space<vmem>>, vector<8x1xf32>,
    return
  }
  func.func @transform_0(%arg0: i32) -> (i32, i32) {
    %c0_i32 = arith.constant 0 : i32
    %c0_i32_0 = arith.constant 0 : i32
    return %arg0, %c0_i32 : i32, i32
  }
  func.func @transform_1(%arg0: i32) -> (i32, i32) {
    %c0_i32 = arith.constant 0 : i32
    %c0_i32_0 = arith.constant 0 : i32
    %c0_i32_1 = arith.constant 0 : i32
    return %c0_i32, %c0_i32_0 : i32, i32
  }
  func.func @transform_2(%arg0: i32) -> (i32, i32) {
    %c0_i32 = arith.constant 0 : i32
    %c0_i32_0 = arith.constant 0 : i32
    %c0_i32_1 = arith.constant 0 : i32
    return %c0_i32, %c0_i32_0 : i32, i32
  }
  func.func @transform_3(%arg0: i32) -> (i32, i32) {
    %c0_i32 = arith.constant 0 : i32
    %c0_i32_0 = arith.constant 0 : i32
    %c0_i32_1 = arith.constant 0 : i32
    return %c0_i32, %c0_i32_0 : i32, i32
  }
  func.func @transform_4(%arg0: i32) -> (i32, i32) {
    %c0_i32 = arith.constant 0 : i32
    %c0_i32_0 = arith.constant 0 : i32
    %c0_i32_1 = arith.constant 0 : i32
    return %c0_i32, %c0_i32_0 : i32, i32
  }
  func.func @transform_5(%arg0: i32) -> (i32, i32) {
    %c0_i32 = arith.constant 0 : i32
    %c0_i32_0 = arith.constant 0 : i32
    return %arg0, %c0_i32 : i32, i32
  }
}

</mosaic_0001>

<llo_original>
// kernel: tpu_custom_call.1
$region0: #{tpu_custom_call.1}
  #allocation0 [shape = 'u32[]', space=smem, size = 0x4, offset = 0x4, fixed_abs, tag = 'smem constant byte address 0x4 - core index']
  #allocation1 [shape = 'u32[144,128]{1,0:T(1,128)}', space=vmem, size = 0x12000, scoped, tag = 'internal scratch']
  #allocation2 [shape = 'f32[1,1]{1,0:T(1,128)S(1)}', space=vmem, size = 0x200, scoped, tag = 'scoped memory for tpu_custom_call.1']
  %s0 = inlined_call_operand.vmem [shape: f32[8,100], index: 0, kind: input, shape index: {}]
  %s1 = inlined_call_operand.vmem [shape: f32[100,64], index: 1, kind: input, shape index: {}]
  %s2 = inlined_call_operand.vmem [shape: f32[1,64], index: 2, kind: input, shape index: {}]
  %s3 = inlined_call_operand.vmem [shape: f32[1,64], index: 3, kind: input, shape index: {}]
  %s4 = inlined_call_operand.<no memory space> [shape: f32[1,1], index: 4, kind: input, shape index: {}]
  %s5 = inlined_call_operand.vmem [shape: f32[8,1], index: 5, kind: output, shape index: {}]
  %s6 = sld [smem:[#allocation0]]
  $region30: #{tpu_custom_call.1} parent=0
    _
  %s8 = ssub.s32 1, %s6
  %s9 = scalar_select 0, %s8, %s6
  %v10 = vstv %s4
  %11 = vst [vmem:[#allocation2] sm:$0x1] %v10
  // Predicated region
  $region2: #{tpu_custom_call.1} parent=0 // pred_check
    _
  $region3: #{tpu_custom_call.1} parent=0 // pred_check_branch
    %13 = sbr.rel (0) target = $region5
  $region4: #{tpu_custom_call.1} parent=0 // pred_region
    _
  $region5: #{tpu_custom_call.1} parent=0 // pred_fallthru
    _
  // Predicated region
  $region6: #{tpu_custom_call.1} parent=0 // pred_check
    _
  $region7: #{tpu_custom_call.1} parent=0 // pred_check_branch
    %15 = sbr.rel (0) target = $region9
  $region8: #{tpu_custom_call.1} parent=0 // pred_region
    _
  $region9: #{tpu_custom_call.1} parent=0 // pred_fallthru
    _
  // Predicated region
  $region10: #{tpu_custom_call.1} parent=0 // pred_check
    _
  $region11: #{tpu_custom_call.1} parent=0 // pred_check_branch
    %17 = sbr.rel (0) target = $region13
  $region12: #{tpu_custom_call.1} parent=0 // pred_region
    _
  $region13: #{tpu_custom_call.1} parent=0 // pred_fallthru
    _
  // Predicated region
  $region14: #{tpu_custom_call.1} parent=0 // pred_check
    _
  $region15: #{tpu_custom_call.1} parent=0 // pred_check_branch
    %19 = sbr.rel (0) target = $region17
  $region16: #{tpu_custom_call.1} parent=0 // pred_region
    _
  $region17: #{tpu_custom_call.1} parent=0 // pred_fallthru
    _
  // Predicated region
  $region18: #{tpu_custom_call.1} parent=0 // pred_check
    _
  $region19: #{tpu_custom_call.1} parent=0 // pred_check_branch
    %21 = sbr.rel (0) target = $region21
  $region20: #{tpu_custom_call.1} parent=0 // pred_region
    _
  $region21: #{tpu_custom_call.1} parent=0 // pred_fallthru
    _
  %v22 = vld [vmem:[%s0] sm:$0xff]
  %v23 = vld [vmem:[%s1] sm:$0xff]
  %v24 = vld [vmem:[%s1 + $0x8] sm:$0xff]
  %v25 = vld [vmem:[%s1 + $0x10] sm:$0xff]
  %v26 = vld [vmem:[%s1 + $0x18] sm:$0xff]
  %v27 = vld [vmem:[%s1 + $0x20] sm:$0xff]
  %v28 = vld [vmem:[%s1 + $0x28] sm:$0xff]
  %v29 = vld [vmem:[%s1 + $0x30] sm:$0xff]
  %v30 = vld [vmem:[%s1 + $0x38] sm:$0xff]
  %v31 = vld [vmem:[%s1 + $0x40] sm:$0xff]
  %v32 = vld [vmem:[%s1 + $0x48] sm:$0xff]
  %v33 = vld [vmem:[%s1 + $0x50] sm:$0xff]
  %v34 = vld [vmem:[%s1 + $0x58] sm:$0xff]
  %v35 = vld [vmem:[%s1 + $0x60] sm:$0xf]
  %v36 = vld [vmem:[%s2] sm:$0x1]
  %v38 = vlaneseq
  %v39 = vshrl.u32 %v38, 7
  %v40 = vsub.s32 0, %v39
  %v41 = vrot.slane %v36, %v40
  %vm43 = vcmask 818176
  %v45 = vsel %vm43, %v22, 0
  %vm47 = vcmask 1043456
  %v49 = vsel %vm47, %v35, 0
  %51 = vmatprep.subr.mxu0 0.0
  %52 = vmatpush1.msra.mxu0 %v23
  %53 = vmatprep.subr.mxu0 0.0
  %54 = vmatpush1.msra.mxu0 %v24
  %55 = vmatprep.subr.mxu0 0.0
  %56 = vmatpush1.msra.mxu0 %v25
  %57 = vmatprep.subr.mxu0 0.0
  %58 = vmatpush1.msra.mxu0 %v26
  %59 = vmatprep.subr.mxu0 0.0
  %60 = vmatpush1.msra.mxu0 %v27
  %61 = vmatprep.subr.mxu0 0.0
  %62 = vmatpush1.msra.mxu0 %v28
  %63 = vmatprep.subr.mxu0 0.0
  %64 = vmatpush1.msra.mxu0 %v29
  %65 = vmatprep.subr.mxu0 0.0
  %66 = vmatpush1.msra.mxu0 %v30
  %67 = vmatprep.subr.mxu0 0.0
  %68 = vmatpush1.msra.mxu0 %v31
  %69 = vmatprep.subr.mxu0 0.0
  %70 = vmatpush1.msra.mxu0 %v32
  %71 = vmatprep.subr.mxu0 0.0
  %72 = vmatpush1.msra.mxu0 %v33
  %73 = vmatprep.subr.mxu0 0.0
  %74 = vmatpush1.msra.mxu0 %v34
  %75 = vmatprep.subr.mxu0 0.0
  %76 = vmatpush1.msra.mxu0 %v49
  %77 = vmatprep.subr.mxu0 0.0
  %78 = vmatpush1.msra.mxu0 0.0
  %79 = vmatprep.subr.mxu0 0.0
  %80 = vmatpush1.msra.mxu0 0.0
  %81 = vmatprep.subr.mxu0 0.0
  %82 = vmatpush1.msra.mxu0 0.0
  %83 = vmatprep.subr.mxu0 0.0
  %84 = vmatpush1.msra.mxu0 0.0
  %85 = vmatprep.subr.mxu0 0.0
  %86 = vmatpush1.msra.mxu0 0.0
  %87 = vmatprep.subr.mxu0 0.0
  %88 = vmatpush1.msra.mxu0 0.0
  %89 = vmatprep.subr.mxu0 0.0
  %90 = vmatpush1.msra.mxu0 0.0
  %91 = vmatprep.subr.mxu0 0.0
  %92 = vmatpush1.msra.mxu0 0.0
  %93 = vmatprep.subr.mxu0 0.0
  %94 = vmatpush1.msra.mxu0 0.0
  %95 = vmatprep.subr.mxu0 0.0
  %96 = vmatpush1.msra.mxu0 0.0
  %97 = vmatprep.subr.mxu0 0.0
  %98 = vmatpush1.msra.mxu0 0.0
  %99 = vmatprep.subr.mxu0 0.0
  %100 = vmatpush1.msra.mxu0 0.0
  %101 = vmatprep.subr.mxu0 0.0
  %102 = vmatpush1.msra.mxu0 0.0
  %103 = vmatprep.subr.mxu0 0.0
  %104 = vmatpush1.msra.mxu0 0.0
  %105 = vmatprep.subr.mxu0 0.0
  %106 = vmatpush1.msra.mxu0 0.0
  %107 = vmatprep.subr.mxu0 0.0
  %108 = vmatpush1.msra.mxu0 0.0
  %109 = vmatprep.subr.mxu0 0.0
  %110 = vmatpush1.msra.mxu0 0.0
  %111 = vmatprep.subr.mxu0 0.0
  %112 = vmatpush1.msra.mxu0 0.0
  %113 = vmatprep.subr.mxu0 0.0
  %114 = vmatpush1.msra.mxu0 0.0
  %115 = vmatprep.mubr.f32.mxu0 0.0
  %116 = vmatmul.mubr.f32.gmra.mrb[0].mxu0 %v45
  %v117 = vpop.f32.mrb[0].mxu0
  %v118 = vadd.f32 %v41, %v117
  %v119 = vpop.f32.mrb[0].mxu0
  %120 = vdwg.mxu0
  %v121 = vmax.f32 %v118, 0.0
  %v122 = vld [vmem:[%s3] sm:$0x1]
  %v124 = vlaneseq
  %v125 = vshrl.u32 %v124, 7
  %v126 = vsub.s32 0, %v125
  %v127 = vrot.slane %v122, %v126
  %v129 = vmul.f32 %v121, %v127
  %vm130 = vcmask 523264
  %v131 = vsel %vm130, %v129, 0.0
  %132 = vadd.xlane.f32.xlu0 %v131
  %v133 = vpop.xlane.xlu0 %132
  %v134 = vld [vmem:[#allocation2] sm:$0x1]
  %v136 = vlaneseq
  %v137 = vshrl.u32 %v136, 7
  %v138 = vsub.s32 0, %v137
  %v139 = vrot.slane %v134, %v138
  %v141 = vadd.f32 %v133, %v139
  %vm142 = vcmask 7168
  %143 = vst.msk [vmem:[%s5] sm:$0xff] %vm142, %v141
  // Predicated region
  $region22: #{tpu_custom_call.1} parent=0 // pred_check
    _
  $region23: #{tpu_custom_call.1} parent=0 // pred_check_branch
    %145 = sbr.rel (0) target = $region25
  $region24: #{tpu_custom_call.1} parent=0 // pred_region
    _
  $region25: #{tpu_custom_call.1} parent=0 // pred_fallthru
    _
  // Predicated region
  $region26: #{tpu_custom_call.1} parent=0 // pred_check
    _
  $region27: #{tpu_custom_call.1} parent=0 // pred_check_branch
    %147 = sbr.rel (0) target = $region29
  $region28: #{tpu_custom_call.1} parent=0 // pred_region
    _
  $region29: #{tpu_custom_call.1} parent=0 // pred_fallthru
    _

</llo_original>
